<compile_context>
chip_gen: v6e
topology: v6e:2x2x1
jax: 0.10.0
libtpu: 0.0.40
codegen_flags: <defaults>
</compile_context>

<pallas_src>
import functools

import jax
import jax.numpy as jnp
from jax.experimental import pallas as pl
from jax.experimental.pallas import tpu as pltpu


def _lstm_classifier_kernel(x_ref, wih_ref, whh_ref, b_ref, wcls_ref, bcls_ref,
                            y_ref, hn_ref, cn_ref, xproj_ref,
                            *, seq_len, batch, unroll):
    """Whole sequence processed in one kernel invocation (no grid).

    x_ref     : (T*B, in_c)  flattened time-major input sequence
    wih_ref   : (in_c, 4H)   fused input->gate weights, gate order (i, f, g, o)
    whh_ref   : (H, 4H)      fused hidden->gate weights
    b_ref     : (1, 4H)      combined bias (b_ih + b_hh)
    wcls_ref  : (1, H)       classifier weight row
    bcls_ref  : (1, 1)       classifier bias
    y_ref     : (B, 1)       sigmoid(classifier(h_T))
    hn_ref    : (B, H)       final hidden state
    cn_ref    : (B, H)       final cell state
    xproj_ref : (T*B, 4H)    VMEM scratch holding x @ W_ih + b for all steps
    """
    H = whh_ref.shape[0]

    # Hidden->gate weights stay hot in vregs across the (unrolled) loop.
    whh = whh_ref[...]

    # One fused MXU pass for the input projection of the entire sequence;
    # the bias broadcast is folded in here once instead of once per step.
    xproj_ref[...] = (
        jnp.dot(x_ref[...], wih_ref[...], preferred_element_type=jnp.float32)
        + b_ref[...])

    h0 = jnp.zeros(hn_ref.shape, jnp.float32)
    c0 = jnp.zeros(cn_ref.shape, jnp.float32)

    def step(t, carry):
        h_prev, c_prev = carry
        row0 = pl.multiple_of(t * batch, batch)          # aligned sublane window
        pre = (xproj_ref[pl.ds(row0, batch), :]
               + jnp.dot(h_prev, whh, preferred_element_type=jnp.float32))
        i_g = jax.nn.sigmoid(pre[:, 0 * H:1 * H])
        f_g = jax.nn.sigmoid(pre[:, 1 * H:2 * H])
        g_g = jnp.tanh(pre[:, 2 * H:3 * H])
        o_g = jax.nn.sigmoid(pre[:, 3 * H:4 * H])
        c_new = f_g * c_prev + i_g * g_g
        h_new = o_g * jnp.tanh(c_new)
        return (h_new, c_new)

    h_fin, c_fin = jax.lax.fori_loop(0, seq_len, step, (h0, c0), unroll=unroll)

    hn_ref[...] = h_fin
    cn_ref[...] = c_fin
    # Classifier head: VPU multiply + lane reduction instead of an N=1 matmul.
    logits = (jnp.sum(h_fin * wcls_ref[...], axis=-1, keepdims=True)
              + bcls_ref[...])
    y_ref[...] = jax.nn.sigmoid(logits)


def lstm_classifier_forward(x, params):
    """x: (T, B, in_c) float32. Returns (y (B,1), (h_n (1,B,H), c_n (1,B,H)))."""
    T, B, in_c = x.shape
    H = params["w_hh"].shape[0]

    # Pad batch up to a multiple of 8 sublanes (f32); padding rows compute on
    # zeros and are dropped below.
    B_pad = max(8, ((B + 7) // 8) * 8)
    x_p = x if B_pad == B else jnp.pad(x, ((0, 0), (0, B_pad - B), (0, 0)))
    x_flat = x_p.reshape(T * B_pad, in_c)      # contiguous reshape (free)

    vmem = lambda: pl.BlockSpec(memory_space=pltpu.MemorySpace.VMEM)
    kernel = functools.partial(_lstm_classifier_kernel,
                               seq_len=T, batch=B_pad, unroll=(T <= 32))

    y, h_n, c_n = pl.pallas_call(
        kernel,
        out_shape=(
            jax.ShapeDtypeStruct((B_pad, 1), jnp.float32),
            jax.ShapeDtypeStruct((B_pad, H), jnp.float32),
            jax.ShapeDtypeStruct((B_pad, H), jnp.float32),
        ),
        in_specs=[vmem() for _ in range(6)],
        out_specs=(vmem(), vmem(), vmem()),
        scratch_shapes=[pltpu.VMEM((T * B_pad, 4 * H), jnp.float32)],
    )(x_flat, params["w_ih"], params["w_hh"], params["b"],
      params["w_cls"], params["b_cls"])

    y, h_n, c_n = y[:B], h_n[:B], c_n[:B]
    return y, (h_n[None, :, :], c_n[None, :, :])


def init_params(key, in_c, hid_c):
    """Deterministic init mirroring PyTorch's uniform(-1/sqrt(H), 1/sqrt(H)),
    stored in the fused (·, 4H) layout with gate order (i, f, g, o)."""
    k = 1.0 / jnp.sqrt(jnp.float32(hid_c))
    keys = jax.random.split(key, 6)
    w_ih = jax.random.uniform(keys[0], (in_c, 4 * hid_c), jnp.float32, -k, k)
    w_hh = jax.random.uniform(keys[1], (hid_c, 4 * hid_c), jnp.float32, -k, k)
    b_ih = jax.random.uniform(keys[2], (1, 4 * hid_c), jnp.float32, -k, k)
    b_hh = jax.random.uniform(keys[3], (1, 4 * hid_c), jnp.float32, -k, k)
    w_cls = jax.random.uniform(keys[4], (1, hid_c), jnp.float32, -k, k)
    b_cls = jax.random.uniform(keys[5], (1, 1), jnp.float32, -k, k)
    return {"w_ih": w_ih, "w_hh": w_hh, "b": b_ih + b_hh,
            "w_cls": w_cls, "b_cls": b_cls}


def reference_forward(x, params):
    """Pure-JAX reference (lax.scan) for correctness checking."""
    T, B, in_c = x.shape
    H = params["w_hh"].shape[0]
    wih, whh, b = params["w_ih"], params["w_hh"], params["b"]

    def step(carry, x_t):
        h, c = carry
        pre = x_t @ wih + h @ whh + b
        i = jax.nn.sigmoid(pre[:, 0 * H:1 * H])
        f = jax.nn.sigmoid(pre[:, 1 * H:2 * H])
        g = jnp.tanh(pre[:, 2 * H:3 * H])
        o = jax.nn.sigmoid(pre[:, 3 * H:4 * H])
        c_new = f * c + i * g
        h_new = o * jnp.tanh(c_new)
        return (h_new, c_new), None

    h0 = jnp.zeros((B, H), jnp.float32)
    c0 = jnp.zeros((B, H), jnp.float32)
    (h_n, c_n), _ = jax.lax.scan(step, (h0, c0), x)
    y = jax.nn.sigmoid(jnp.sum(h_n * params["w_cls"], axis=-1, keepdims=True)
                       + params["b_cls"])
    return y, (h_n[None], c_n[None])


if __name__ == "__main__":
    T, B, in_c, hid_c = 8, 2, 4, 32

    key = jax.random.PRNGKey(0)
    kx, kp = jax.random.split(key)
    x = jax.random.normal(kx, (T, B, in_c), dtype=jnp.float32)
    params = init_params(kp, in_c, hid_c)

    y, (h_n, c_n) = lstm_classifier_forward(x, params)
    jax.block_until_ready((y, h_n, c_n))

    y_ref, (h_ref, c_ref) = reference_forward(x, params)
    assert jnp.allclose(y, y_ref, atol=1e-5), "classifier output mismatch"
    assert jnp.allclose(h_n, h_ref, atol=1e-5), "h_n mismatch"
    assert jnp.allclose(c_n, c_ref, atol=1e-5), "c_n mismatch"

    print("KERNEL_OK")
</pallas_src>

<mosaic_0001>
module attributes {stable_mosaic.version = 11 : i64} {
  func.func @_lstm_classifier_kernel(%arg0: memref<64x4xf32, #tpu.memory_space<vmem>>, %arg1: memref<4x128xf32, #tpu.memory_space<vmem>>, %arg2: memref<32x128xf32, #tpu.memory_space<vmem>>, %arg3: memref<1x128xf32, #tpu.memory_space<vmem>>, %arg4: memref<1x32xf32, #tpu.memory_space<vmem>>, %arg5: memref<1x1xf32, #tpu.memory_space<vmem>>, %arg6: memref<8x1xf32, #tpu.memory_space<vmem>>, %arg7: memref<8x32xf32, #tpu.memory_space<vmem>>, %arg8: memref<8x32xf32, #tpu.memory_space<vmem>>, %arg9: memref<64x128xf32, #tpu.memory_space<vmem>>) attributes {dimension_semantics = [], scalar_prefetch = 0 : i64, scratch_operands = 1 : i64, tpu.core_type = #tpu.core_type<tc>} {
    %c0 = arith.constant 0 : index
    %c0_0 = arith.constant 0 : index
    %0 = vector.load %arg2[%c0, %c0_0] : memref<32x128xf32, #tpu.memory_space<vmem>>, vector<32x128xf32>
    %c0_1 = arith.constant 0 : index
    %c0_2 = arith.constant 0 : index
    %1 = vector.load %arg0[%c0_1, %c0_2] : memref<64x4xf32, #tpu.memory_space<vmem>>, vector<64x4xf32>
    %c0_3 = arith.constant 0 : index
    %c0_4 = arith.constant 0 : index
    %2 = vector.load %arg1[%c0_3, %c0_4] : memref<4x128xf32, #tpu.memory_space<vmem>>, vector<4x128xf32>
    %cst = arith.constant dense<0.000000e+00> : vector<64x128xf32>
    %3 = tpu.matmul %1, %2, %cst {dimension_numbers = #tpu.dot_dimension_numbers<[1], [0], [0], [1], [0, 0, 1, 1], [], []>} : vector<64x4xf32>, vector<4x128xf32>, vector<64x128xf32> -> vector<64x128xf32>
    %c0_5 = arith.constant 0 : index
    %c0_6 = arith.constant 0 : index
    %4 = vector.load %arg3[%c0_5, %c0_6] : memref<1x128xf32, #tpu.memory_space<vmem>>, vector<1x128xf32>
    %5 = vector.broadcast %4 : vector<1x128xf32> to vector<64x128xf32>
    %6 = arith.addf %3, %5 : vector<64x128xf32>
    %c0_7 = arith.constant 0 : index
    %c0_8 = arith.constant 0 : index
    %7 = vector.load %arg9[%c0_7, %c0_8] : memref<64x128xf32, #tpu.memory_space<vmem>>, vector<64x128xf32>
    tpu.vector_store %arg9[%c0_7, %c0_8], %6 {strides = array<i32>} : memref<64x128xf32, #tpu.memory_space<vmem>>, vector<64x128xf32>,
    %cst_9 = arith.constant 0.000000e+00 : f32
    %8 = vector.broadcast %cst_9 : f32 to vector<8x32xf32>
    %cst_10 = arith.constant 0.000000e+00 : f32
    %9 = vector.broadcast %cst_10 : f32 to vector<8x32xf32>
    %c0_i32 = arith.constant 0 : i32
    %c8_i32 = arith.constant 8 : i32
    %10 = arith.muli %c0_i32, %c8_i32 : i32
    %11 = tpu.assume_multiple %10, 8 : i32
    %12 = arith.index_cast %11 : i32 to index
    %c0_11 = arith.constant 0 : index
    %13 = vector.load %arg9[%12, %c0_11] : memref<64x128xf32, #tpu.memory_space<vmem>>, vector<8x128xf32>
    %cst_12 = arith.constant dense<0.000000e+00> : vector<8x128xf32>
    %14 = tpu.matmul %8, %0, %cst_12 {dimension_numbers = #tpu.dot_dimension_numbers<[1], [0], [0], [1], [0, 0, 1, 1], [], []>} : vector<8x32xf32>, vector<32x128xf32>, vector<8x128xf32> -> vector<8x128xf32>
    %15 = arith.addf %13, %14 : vector<8x128xf32>
    %16 = vector.extract_strided_slice %15 {offsets = [0, 0], sizes = [8, 32], strides = [1, 1]} : vector<8x128xf32> to vector<8x32xf32>
    %17 = arith.negf %16 : vector<8x32xf32>
    %18 = math.exp %17 : vector<8x32xf32>
    %cst_13 = arith.constant 1.000000e+00 : f32
    %19 = vector.broadcast %cst_13 : f32 to vector<8x32xf32>
    %20 = arith.addf %19, %18 : vector<8x32xf32>
    %21 = arith.divf %19, %20 : vector<8x32xf32>
    %22 = vector.extract_strided_slice %15 {offsets = [0, 32], sizes = [8, 32], strides = [1, 1]} : vector<8x128xf32> to vector<8x32xf32>
    %23 = arith.negf %22 : vector<8x32xf32>
    %24 = math.exp %23 : vector<8x32xf32>
    %cst_14 = arith.constant 1.000000e+00 : f32
    %25 = vector.broadcast %cst_14 : f32 to vector<8x32xf32>
    %26 = arith.addf %25, %24 : vector<8x32xf32>
    %27 = arith.divf %25, %26 : vector<8x32xf32>
    %28 = vector.extract_strided_slice %15 {offsets = [0, 64], sizes = [8, 32], strides = [1, 1]} : vector<8x128xf32> to vector<8x32xf32>
    %29 = math.tanh %28 : vector<8x32xf32>
    %30 = vector.extract_strided_slice %15 {offsets = [0, 96], sizes = [8, 32], strides = [1, 1]} : vector<8x128xf32> to vector<8x32xf32>
    %31 = arith.negf %30 : vector<8x32xf32>
    %32 = math.exp %31 : vector<8x32xf32>
    %cst_15 = arith.constant 1.000000e+00 : f32
    %33 = vector.broadcast %cst_15 : f32 to vector<8x32xf32>
    %34 = arith.addf %33, %32 : vector<8x32xf32>
    %35 = arith.divf %33, %34 : vector<8x32xf32>
    %36 = arith.mulf %27, %9 : vector<8x32xf32>
    %37 = arith.mulf %21, %29 : vector<8x32xf32>
    %38 = arith.addf %36, %37 : vector<8x32xf32>
    %39 = math.tanh %38 : vector<8x32xf32>
    %40 = arith.mulf %35, %39 : vector<8x32xf32>
    %c1_i32 = arith.constant 1 : i32
    %c8_i32_16 = arith.constant 8 : i32
    %41 = arith.muli %c1_i32, %c8_i32_16 : i32
    %42 = tpu.assume_multiple %41, 8 : i32
    %43 = arith.index_cast %42 : i32 to index
    %c0_17 = arith.constant 0 : index
    %44 = vector.load %arg9[%43, %c0_17] : memref<64x128xf32, #tpu.memory_space<vmem>>, vector<8x128xf32>
    %cst_18 = arith.constant dense<0.000000e+00> : vector<8x128xf32>
    %45 = tpu.matmul %40, %0, %cst_18 {dimension_numbers = #tpu.dot_dimension_numbers<[1], [0], [0], [1], [0, 0, 1, 1], [], []>} : vector<8x32xf32>, vector<32x128xf32>, vector<8x128xf32> -> vector<8x128xf32>
    %46 = arith.addf %44, %45 : vector<8x128xf32>
    %47 = vector.extract_strided_slice %46 {offsets = [0, 0], sizes = [8, 32], strides = [1, 1]} : vector<8x128xf32> to vector<8x32xf32>
    %48 = arith.negf %47 : vector<8x32xf32>
    %49 = math.exp %48 : vector<8x32xf32>
    %cst_19 = arith.constant 1.000000e+00 : f32
    %50 = vector.broadcast %cst_19 : f32 to vector<8x32xf32>
    %51 = arith.addf %50, %49 : vector<8x32xf32>
    %52 = arith.divf %50, %51 : vector<8x32xf32>
    %53 = vector.extract_strided_slice %46 {offsets = [0, 32], sizes = [8, 32], strides = [1, 1]} : vector<8x128xf32> to vector<8x32xf32>
    %54 = arith.negf %53 : vector<8x32xf32>
    %55 = math.exp %54 : vector<8x32xf32>
    %cst_20 = arith.constant 1.000000e+00 : f32
    %56 = vector.broadcast %cst_20 : f32 to vector<8x32xf32>
    %57 = arith.addf %56, %55 : vector<8x32xf32>
    %58 = arith.divf %56, %57 : vector<8x32xf32>
    %59 = vector.extract_strided_slice %46 {offsets = [0, 64], sizes = [8, 32], strides = [1, 1]} : vector<8x128xf32> to vector<8x32xf32>
    %60 = math.tanh %59 : vector<8x32xf32>
    %61 = vector.extract_strided_slice %46 {offsets = [0, 96], sizes = [8, 32], strides = [1, 1]} : vector<8x128xf32> to vector<8x32xf32>
    %62 = arith.negf %61 : vector<8x32xf32>
    %63 = math.exp %62 : vector<8x32xf32>
    %cst_21 = arith.constant 1.000000e+00 : f32
    %64 = vector.broadcast %cst_21 : f32 to vector<8x32xf32>
    %65 = arith.addf %64, %63 : vector<8x32xf32>
    %66 = arith.divf %64, %65 : vector<8x32xf32>
    %67 = arith.mulf %58, %38 : vector<8x32xf32>
    %68 = arith.mulf %52, %60 : vector<8x32xf32>
    %69 = arith.addf %67, %68 : vector<8x32xf32>
    %70 = math.tanh %69 : vector<8x32xf32>
    %71 = arith.mulf %66, %70 : vector<8x32xf32>
    %c2_i32 = arith.constant 2 : i32
    %c8_i32_22 = arith.constant 8 : i32
    %72 = arith.muli %c2_i32, %c8_i32_22 : i32
    %73 = tpu.assume_multiple %72, 8 : i32
    %74 = arith.index_cast %73 : i32 to index
    %c0_23 = arith.constant 0 : index
    %75 = vector.load %arg9[%74, %c0_23] : memref<64x128xf32, #tpu.memory_space<vmem>>, vector<8x128xf32>
    %cst_24 = arith.constant dense<0.000000e+00> : vector<8x128xf32>
    %76 = tpu.matmul %71, %0, %cst_24 {dimension_numbers = #tpu.dot_dimension_numbers<[1], [0], [0], [1], [0, 0, 1, 1], [], []>} : vector<8x32xf32>, vector<32x128xf32>, vector<8x128xf32> -> vector<8x128xf32>
    %77 = arith.addf %75, %76 : vector<8x128xf32>
    %78 = vector.extract_strided_slice %77 {offsets = [0, 0], sizes = [8, 32], strides = [1, 1]} : vector<8x128xf32> to vector<8x32xf32>
    %79 = arith.negf %78 : vector<8x32xf32>
    %80 = math.exp %79 : vector<8x32xf32>
    %cst_25 = arith.constant 1.000000e+00 : f32
    %81 = vector.broadcast %cst_25 : f32 to vector<8x32xf32>
    %82 = arith.addf %81, %80 : vector<8x32xf32>
    %83 = arith.divf %81, %82 : vector<8x32xf32>
    %84 = vector.extract_strided_slice %77 {offsets = [0, 32], sizes = [8, 32], strides = [1, 1]} : vector<8x128xf32> to vector<8x32xf32>
    %85 = arith.negf %84 : vector<8x32xf32>
    %86 = math.exp %85 : vector<8x32xf32>
    %cst_26 = arith.constant 1.000000e+00 : f32
    %87 = vector.broadcast %cst_26 : f32 to vector<8x32xf32>
    %88 = arith.addf %87, %86 : vector<8x32xf32>
    %89 = arith.divf %87, %88 : vector<8x32xf32>
    %90 = vector.extract_strided_slice %77 {offsets = [0, 64], sizes = [8, 32], strides = [1, 1]} : vector<8x128xf32> to vector<8x32xf32>
    %91 = math.tanh %90 : vector<8x32xf32>
    %92 = vector.extract_strided_slice %77 {offsets = [0, 96], sizes = [8, 32], strides = [1, 1]} : vector<8x128xf32> to vector<8x32xf32>
    %93 = arith.negf %92 : vector<8x32xf32>
    %94 = math.exp %93 : vector<8x32xf32>
    %cst_27 = arith.constant 1.000000e+00 : f32
    %95 = vector.broadcast %cst_27 : f32 to vector<8x32xf32>
    %96 = arith.addf %95, %94 : vector<8x32xf32>
    %97 = arith.divf %95, %96 : vector<8x32xf32>
    %98 = arith.mulf %89, %69 : vector<8x32xf32>
    %99 = arith.mulf %83, %91 : vector<8x32xf32>
    %100 = arith.addf %98, %99 : vector<8x32xf32>
    %101 = math.tanh %100 : vector<8x32xf32>
    %102 = arith.mulf %97, %101 : vector<8x32xf32>
    %c3_i32 = arith.constant 3 : i32
    %c8_i32_28 = arith.constant 8 : i32
    %103 = arith.muli %c3_i32, %c8_i32_28 : i32
    %104 = tpu.assume_multiple %103, 8 : i32
    %105 = arith.index_cast %104 : i32 to index
    %c0_29 = arith.constant 0 : index
    %106 = vector.load %arg9[%105, %c0_29] : memref<64x128xf32, #tpu.memory_space<vmem>>, vector<8x128xf32>
    %cst_30 = arith.constant dense<0.000000e+00> : vector<8x128xf32>
    %107 = tpu.matmul %102, %0, %cst_30 {dimension_numbers = #tpu.dot_dimension_numbers<[1], [0], [0], [1], [0, 0, 1, 1], [], []>} : vector<8x32xf32>, vector<32x128xf32>, vector<8x128xf32> -> vector<8x128xf32>
    %108 = arith.addf %106, %107 : vector<8x128xf32>
    %109 = vector.extract_strided_slice %108 {offsets = [0, 0], sizes = [8, 32], strides = [1, 1]} : vector<8x128xf32> to vector<8x32xf32>
    %110 = arith.negf %109 : vector<8x32xf32>
    %111 = math.exp %110 : vector<8x32xf32>
    %cst_31 = arith.constant 1.000000e+00 : f32
    %112 = vector.broadcast %cst_31 : f32 to vector<8x32xf32>
    %113 = arith.addf %112, %111 : vector<8x32xf32>
    %114 = arith.divf %112, %113 : vector<8x32xf32>
    %115 = vector.extract_strided_slice %108 {offsets = [0, 32], sizes = [8, 32], strides = [1, 1]} : vector<8x128xf32> to vector<8x32xf32>
    %116 = arith.negf %115 : vector<8x32xf32>
    %117 = math.exp %116 : vector<8x32xf32>
    %cst_32 = arith.constant 1.000000e+00 : f32
    %118 = vector.broadcast %cst_32 : f32 to vector<8x32xf32>
    %119 = arith.addf %118, %117 : vector<8x32xf32>
    %120 = arith.divf %118, %119 : vector<8x32xf32>
    %121 = vector.extract_strided_slice %108 {offsets = [0, 64], sizes = [8, 32], strides = [1, 1]} : vector<8x128xf32> to vector<8x32xf32>
    %122 = math.tanh %121 : vector<8x32xf32>
    %123 = vector.extract_strided_slice %108 {offsets = [0, 96], sizes = [8, 32], strides = [1, 1]} : vector<8x128xf32> to vector<8x32xf32>
    %124 = arith.negf %123 : vector<8x32xf32>
    %125 = math.exp %124 : vector<8x32xf32>
    %cst_33 = arith.constant 1.000000e+00 : f32
    %126 = vector.broadcast %cst_33 : f32 to vector<8x32xf32>
    %127 = arith.addf %126, %125 : vector<8x32xf32>
    %128 = arith.divf %126, %127 : vector<8x32xf32>
    %129 = arith.mulf %120, %100 : vector<8x32xf32>
    %130 = arith.mulf %114, %122 : vector<8x32xf32>
    %131 = arith.addf %129, %130 : vector<8x32xf32>
    %132 = math.tanh %131 : vector<8x32xf32>
    %133 = arith.mulf %128, %132 : vector<8x32xf32>
    %c4_i32 = arith.constant 4 : i32
    %c8_i32_34 = arith.constant 8 : i32
    %134 = arith.muli %c4_i32, %c8_i32_34 : i32
    %135 = tpu.assume_multiple %134, 8 : i32
    %136 = arith.index_cast %135 : i32 to index
    %c0_35 = arith.constant 0 : index
    %137 = vector.load %arg9[%136, %c0_35] : memref<64x128xf32, #tpu.memory_space<vmem>>, vector<8x128xf32>
    %cst_36 = arith.constant dense<0.000000e+00> : vector<8x128xf32>
    %138 = tpu.matmul %133, %0, %cst_36 {dimension_numbers = #tpu.dot_dimension_numbers<[1], [0], [0], [1], [0, 0, 1, 1], [], []>} : vector<8x32xf32>, vector<32x128xf32>, vector<8x128xf32> -> vector<8x128xf32>
    %139 = arith.addf %137, %138 : vector<8x128xf32>
    %140 = vector.extract_strided_slice %139 {offsets = [0, 0], sizes = [8, 32], strides = [1, 1]} : vector<8x128xf32> to vector<8x32xf32>
    %141 = arith.negf %140 : vector<8x32xf32>
    %142 = math.exp %141 : vector<8x32xf32>
    %cst_37 = arith.constant 1.000000e+00 : f32
    %143 = vector.broadcast %cst_37 : f32 to vector<8x32xf32>
    %144 = arith.addf %143, %142 : vector<8x32xf32>
    %145 = arith.divf %143, %144 : vector<8x32xf32>
    %146 = vector.extract_strided_slice %139 {offsets = [0, 32], sizes = [8, 32], strides = [1, 1]} : vector<8x128xf32> to vector<8x32xf32>
    %147 = arith.negf %146 : vector<8x32xf32>
    %148 = math.exp %147 : vector<8x32xf32>
    %cst_38 = arith.constant 1.000000e+00 : f32
    %149 = vector.broadcast %cst_38 : f32 to vector<8x32xf32>
    %150 = arith.addf %149, %148 : vector<8x32xf32>
    %151 = arith.divf %149, %150 : vector<8x32xf32>
    %152 = vector.extract_strided_slice %139 {offsets = [0, 64], sizes = [8, 32], strides = [1, 1]} : vector<8x128xf32> to vector<8x32xf32>
    %153 = math.tanh %152 : vector<8x32xf32>
    %154 = vector.extract_strided_slice %139 {offsets = [0, 96], sizes = [8, 32], strides = [1, 1]} : vector<8x128xf32> to vector<8x32xf32>
    %155 = arith.negf %154 : vector<8x32xf32>
    %156 = math.exp %155 : vector<8x32xf32>
    %cst_39 = arith.constant 1.000000e+00 : f32
    %157 = vector.broadcast %cst_39 : f32 to vector<8x32xf32>
    %158 = arith.addf %157, %156 : vector<8x32xf32>
    %159 = arith.divf %157, %158 : vector<8x32xf32>
    %160 = arith.mulf %151, %131 : vector<8x32xf32>
    %161 = arith.mulf %145, %153 : vector<8x32xf32>
    %162 = arith.addf %160, %161 : vector<8x32xf32>
    %163 = math.tanh %162 : vector<8x32xf32>
    %164 = arith.mulf %159, %163 : vector<8x32xf32>
    %c5_i32 = arith.constant 5 : i32
    %c8_i32_40 = arith.constant 8 : i32
    %165 = arith.muli %c5_i32, %c8_i32_40 : i32
    %166 = tpu.assume_multiple %165, 8 : i32
    %167 = arith.index_cast %166 : i32 to index
    %c0_41 = arith.constant 0 : index
    %168 = vector.load %arg9[%167, %c0_41] : memref<64x128xf32, #tpu.memory_space<vmem>>, vector<8x128xf32>
    %cst_42 = arith.constant dense<0.000000e+00> : vector<8x128xf32>
    %169 = tpu.matmul %164, %0, %cst_42 {dimension_numbers = #tpu.dot_dimension_numbers<[1], [0], [0], [1], [0, 0, 1, 1], [], []>} : vector<8x32xf32>, vector<32x128xf32>, vector<8x128xf32> -> vector<8x128xf32>
    %170 = arith.addf %168, %169 : vector<8x128xf32>
    %171 = vector.extract_strided_slice %170 {offsets = [0, 0], sizes = [8, 32], strides = [1, 1]} : vector<8x128xf32> to vector<8x32xf32>
    %172 = arith.negf %171 : vector<8x32xf32>
    %173 = math.exp %172 : vector<8x32xf32>
    %cst_43 = arith.constant 1.000000e+00 : f32
    %174 = vector.broadcast %cst_43 : f32 to vector<8x32xf32>
    %175 = arith.addf %174, %173 : vector<8x32xf32>
    %176 = arith.divf %174, %175 : vector<8x32xf32>
    %177 = vector.extract_strided_slice %170 {offsets = [0, 32], sizes = [8, 32], strides = [1, 1]} : vector<8x128xf32> to vector<8x32xf32>
    %178 = arith.negf %177 : vector<8x32xf32>
    %179 = math.exp %178 : vector<8x32xf32>
    %cst_44 = arith.constant 1.000000e+00 : f32
    %180 = vector.broadcast %cst_44 : f32 to vector<8x32xf32>
    %181 = arith.addf %180, %179 : vector<8x32xf32>
    %182 = arith.divf %180, %181 : vector<8x32xf32>
    %183 = vector.extract_strided_slice %170 {offsets = [0, 64], sizes = [8, 32], strides = [1, 1]} : vector<8x128xf32> to vector<8x32xf32>
    %184 = math.tanh %183 : vector<8x32xf32>
    %185 = vector.extract_strided_slice %170 {offsets = [0, 96], sizes = [8, 32], strides = [1, 1]} : vector<8x128xf32> to vector<8x32xf32>
    %186 = arith.negf %185 : vector<8x32xf32>
    %187 = math.exp %186 : vector<8x32xf32>
    %cst_45 = arith.constant 1.000000e+00 : f32
    %188 = vector.broadcast %cst_45 : f32 to vector<8x32xf32>
    %189 = arith.addf %188, %187 : vector<8x32xf32>
    %190 = arith.divf %188, %189 : vector<8x32xf32>
    %191 = arith.mulf %182, %162 : vector<8x32xf32>
    %192 = arith.mulf %176, %184 : vector<8x32xf32>
    %193 = arith.addf %191, %192 : vector<8x32xf32>
    %194 = math.tanh %193 : vector<8x32xf32>
    %195 = arith.mulf %190, %194 : vector<8x32xf32>
    %c6_i32 = arith.constant 6 : i32
    %c8_i32_46 = arith.constant 8 : i32
    %196 = arith.muli %c6_i32, %c8_i32_46 : i32
    %197 = tpu.assume_multiple %196, 8 : i32
    %198 = arith.index_cast %197 : i32 to index
    %c0_47 = arith.constant 0 : index
    %199 = vector.load %arg9[%198, %c0_47] : memref<64x128xf32, #tpu.memory_space<vmem>>, vector<8x128xf32>
    %cst_48 = arith.constant dense<0.000000e+00> : vector<8x128xf32>
    %200 = tpu.matmul %195, %0, %cst_48 {dimension_numbers = #tpu.dot_dimension_numbers<[1], [0], [0], [1], [0, 0, 1, 1], [], []>} : vector<8x32xf32>, vector<32x128xf32>, vector<8x128xf32> -> vector<8x128xf32>
    %201 = arith.addf %199, %200 : vector<8x128xf32>
    %202 = vector.extract_strided_slice %201 {offsets = [0, 0], sizes = [8, 32], strides = [1, 1]} : vector<8x128xf32> to vector<8x32xf32>
    %203 = arith.negf %202 : vector<8x32xf32>
    %204 = math.exp %203 : vector<8x32xf32>
    %cst_49 = arith.constant 1.000000e+00 : f32
    %205 = vector.broadcast %cst_49 : f32 to vector<8x32xf32>
    %206 = arith.addf %205, %204 : vector<8x32xf32>
    %207 = arith.divf %205, %206 : vector<8x32xf32>
    %208 = vector.extract_strided_slice %201 {offsets = [0, 32], sizes = [8, 32], strides = [1, 1]} : vector<8x128xf32> to vector<8x32xf32>
    %209 = arith.negf %208 : vector<8x32xf32>
    %210 = math.exp %209 : vector<8x32xf32>
    %cst_50 = arith.constant 1.000000e+00 : f32
    %211 = vector.broadcast %cst_50 : f32 to vector<8x32xf32>
    %212 = arith.addf %211, %210 : vector<8x32xf32>
    %213 = arith.divf %211, %212 : vector<8x32xf32>
    %214 = vector.extract_strided_slice %201 {offsets = [0, 64], sizes = [8, 32], strides = [1, 1]} : vector<8x128xf32> to vector<8x32xf32>
    %215 = math.tanh %214 : vector<8x32xf32>
    %216 = vector.extract_strided_slice %201 {offsets = [0, 96], sizes = [8, 32], strides = [1, 1]} : vector<8x128xf32> to vector<8x32xf32>
    %217 = arith.negf %216 : vector<8x32xf32>
    %218 = math.exp %217 : vector<8x32xf32>
    %cst_51 = arith.constant 1.000000e+00 : f32
    %219 = vector.broadcast %cst_51 : f32 to vector<8x32xf32>
    %220 = arith.addf %219, %218 : vector<8x32xf32>
    %221 = arith.divf %219, %220 : vector<8x32xf32>
    %222 = arith.mulf %213, %193 : vector<8x32xf32>
    %223 = arith.mulf %207, %215 : vector<8x32xf32>
    %224 = arith.addf %222, %223 : vector<8x32xf32>
    %225 = math.tanh %224 : vector<8x32xf32>
    %226 = arith.mulf %221, %225 : vector<8x32xf32>
    %c7_i32 = arith.constant 7 : i32
    %c8_i32_52 = arith.constant 8 : i32
    %227 = arith.muli %c7_i32, %c8_i32_52 : i32
    %228 = tpu.assume_multiple %227, 8 : i32
    %229 = arith.index_cast %228 : i32 to index
    %c0_53 = arith.constant 0 : index
    %230 = vector.load %arg9[%229, %c0_53] : memref<64x128xf32, #tpu.memory_space<vmem>>, vector<8x128xf32>
    %cst_54 = arith.constant dense<0.000000e+00> : vector<8x128xf32>
    %231 = tpu.matmul %226, %0, %cst_54 {dimension_numbers = #tpu.dot_dimension_numbers<[1], [0], [0], [1], [0, 0, 1, 1], [], []>} : vector<8x32xf32>, vector<32x128xf32>, vector<8x128xf32> -> vector<8x128xf32>
    %232 = arith.addf %230, %231 : vector<8x128xf32>
    %233 = vector.extract_strided_slice %232 {offsets = [0, 0], sizes = [8, 32], strides = [1, 1]} : vector<8x128xf32> to vector<8x32xf32>
    %234 = arith.negf %233 : vector<8x32xf32>
    %235 = math.exp %234 : vector<8x32xf32>
    %cst_55 = arith.constant 1.000000e+00 : f32
    %236 = vector.broadcast %cst_55 : f32 to vector<8x32xf32>
    %237 = arith.addf %236, %235 : vector<8x32xf32>
    %238 = arith.divf %236, %237 : vector<8x32xf32>
    %239 = vector.extract_strided_slice %232 {offsets = [0, 32], sizes = [8, 32], strides = [1, 1]} : vector<8x128xf32> to vector<8x32xf32>
    %240 = arith.negf %239 : vector<8x32xf32>
    %241 = math.exp %240 : vector<8x32xf32>
    %cst_56 = arith.constant 1.000000e+00 : f32
    %242 = vector.broadcast %cst_56 : f32 to vector<8x32xf32>
    %243 = arith.addf %242, %241 : vector<8x32xf32>
    %244 = arith.divf %242, %243 : vector<8x32xf32>
    %245 = vector.extract_strided_slice %232 {offsets = [0, 64], sizes = [8, 32], strides = [1, 1]} : vector<8x128xf32> to vector<8x32xf32>
    %246 = math.tanh %245 : vector<8x32xf32>
    %247 = vector.extract_strided_slice %232 {offsets = [0, 96], sizes = [8, 32], strides = [1, 1]} : vector<8x128xf32> to vector<8x32xf32>
    %248 = arith.negf %247 : vector<8x32xf32>
    %249 = math.exp %248 : vector<8x32xf32>
    %cst_57 = arith.constant 1.000000e+00 : f32
    %250 = vector.broadcast %cst_57 : f32 to vector<8x32xf32>
    %251 = arith.addf %250, %249 : vector<8x32xf32>
    %252 = arith.divf %250, %251 : vector<8x32xf32>
    %253 = arith.mulf %244, %224 : vector<8x32xf32>
    %254 = arith.mulf %238, %246 : vector<8x32xf32>
    %255 = arith.addf %253, %254 : vector<8x32xf32>
    %256 = math.tanh %255 : vector<8x32xf32>
    %257 = arith.mulf %252, %256 : vector<8x32xf32>
    %c8_i32_58 = arith.constant 8 : i32
    %c0_59 = arith.constant 0 : index
    %c0_60 = arith.constant 0 : index
    %258 = vector.load %arg7[%c0_59, %c0_60] : memref<8x32xf32, #tpu.memory_space<vmem>>, vector<8x32xf32>
    tpu.vector_store %arg7[%c0_59, %c0_60], %257 {strides = array<i32>} : memref<8x32xf32, #tpu.memory_space<vmem>>, vector<8x32xf32>,
    %c0_61 = arith.constant 0 : index
    %c0_62 = arith.constant 0 : index
    %259 = vector.load %arg8[%c0_61, %c0_62] : memref<8x32xf32, #tpu.memory_space<vmem>>, vector<8x32xf32>
    tpu.vector_store %arg8[%c0_61, %c0_62], %255 {strides = array<i32>} : memref<8x32xf32, #tpu.memory_space<vmem>>, vector<8x32xf32>,
    %c0_63 = arith.constant 0 : index
    %c0_64 = arith.constant 0 : index
    %260 = vector.load %arg4[%c0_63, %c0_64] : memref<1x32xf32, #tpu.memory_space<vmem>>, vector<1x32xf32>
    %261 = vector.broadcast %260 : vector<1x32xf32> to vector<8x32xf32>
    %262 = arith.mulf %257, %261 : vector<8x32xf32>
    %cst_65 = arith.constant dense<0.000000e+00> : vector<8xf32>
    %263 = vector.multi_reduction <add>, %262, %cst_65 [1] : vector<8x32xf32> to vector<8xf32>
    %264 = vector.shape_cast %263 : vector<8xf32> to vector<8x1xf32>
    %c0_66 = arith.constant 0 : index
    %c0_67 = arith.constant 0 : index
    %265 = vector.load %arg5[%c0_66, %c0_67] : memref<1x1xf32, #tpu.memory_space<vmem>>, vector<1x1xf32>
    %266 = vector.broadcast %265 : vector<1x1xf32> to vector<8x1xf32>
    %267 = arith.addf %264, %266 : vector<8x1xf32>
    %268 = arith.negf %267 : vector<8x1xf32>
    %269 = math.exp %268 : vector<8x1xf32>
    %cst_68 = arith.constant 1.000000e+00 : f32
    %270 = vector.broadcast %cst_68 : f32 to vector<8x1xf32>
    %271 = arith.addf %270, %269 : vector<8x1xf32>
    %272 = arith.divf %270, %271 : vector<8x1xf32>
    %c0_69 = arith.constant 0 : index
    %c0_70 = arith.constant 0 : index
    %273 = vector.load %arg6[%c0_69, %c0_70] : memref<8x1xf32, #tpu.memory_space<vmem>>, vector<8x1xf32>
    tpu.vector_store %arg6[%c0_69, %c0_70], %272 {strides = array<i32>} : memref<8x1xf32, #tpu.memory_space<vmem>>, vector<8x1xf32>,
    return
  }
}

</mosaic_0001>

<llo_original>
// kernel: tpu_custom_call.1
$region0: #{tpu_custom_call.1}
  #allocation0 [shape = 'u32[]', space=smem, size = 0x4, offset = 0x4, fixed_abs, tag = 'smem constant byte address 0x4 - core index']
  #allocation1 [shape = 'u32[144,128]{1,0:T(1,128)}', space=vmem, size = 0x12000, scoped, tag = 'internal scratch']
  #allocation2 [shape = 'f32[64,128]{1,0:T(8,128)}', space=vmem, size = 0x8000, scoped, tag = 'scratch operand']
  #allocation3 [shape = 'f32[1,1]{1,0:T(1,128)S(1)}', space=vmem, size = 0x200, scoped, tag = 'scoped memory for tpu_custom_call.1']
  %s0 = inlined_call_operand.vmem [shape: f32[64,4], index: 0, kind: input, shape index: {}]
  %s1 = inlined_call_operand.vmem [shape: f32[4,128], index: 1, kind: input, shape index: {}]
  %s2 = inlined_call_operand.vmem [shape: f32[32,128], index: 2, kind: input, shape index: {}]
  %s3 = inlined_call_operand.vmem [shape: f32[1,128], index: 3, kind: input, shape index: {}]
  %s4 = inlined_call_operand.vmem [shape: f32[1,32], index: 4, kind: input, shape index: {}]
  %s5 = inlined_call_operand.<no memory space> [shape: f32[1,1], index: 5, kind: input, shape index: {}]
  %s6 = inlined_call_operand.vmem [shape: f32[8,1], index: 6, kind: output, shape index: {0}]
  %s7 = inlined_call_operand.hbm [shape: f32[8,32], index: 7, kind: output, shape index: {1}]
  %s8 = inlined_call_operand.hbm [shape: f32[8,32], index: 8, kind: output, shape index: {2}]
  %9 = xla_tuple %s6, %s7, %s8
  %s10 = sld [smem:[#allocation0]]
  $region50: #{tpu_custom_call.1} parent=0
    _
  %s12 = ssub.s32 1, %s10
  %s13 = scalar_select 0, %s12, %s10
  %v14 = vstv %s5
  %15 = vst [vmem:[#allocation3] sm:$0x1] %v14
  $region1: #{tpu_custom_call.1} parent=0
    #allocation4 [shape = 'u8[4096]{0}', space=vmem, size = 0x1000, scoped, tag = 'output window, operand 1, single buffered']
    #allocation5 [shape = 's32[1]{0}', space=sflag, size = 0x4, scoped, tag = 'scoped memory for tpu_custom_call.1']
    #allocation6 [shape = 'u8[4096]{0}', space=vmem, size = 0x1000, scoped, tag = 'output window, operand 2, single buffered']
    #allocation7 [shape = 's32[1]{0}', space=sflag, size = 0x4, scoped, tag = 'scoped memory for tpu_custom_call.1']
    %16 = vsyncpa [#allocation5], 0
    %17 = vsyncpa [#allocation7], 0
    // Predicated region
    $region2: #{tpu_custom_call.1} parent=1 // pred_check
      _
    $region3: #{tpu_custom_call.1} parent=1 // pred_check_branch
      %19 = sbr.rel (0) target = $region5
    $region4: #{tpu_custom_call.1} parent=1 // pred_region
      _
    $region5: #{tpu_custom_call.1} parent=1 // pred_fallthru
      _
    // Predicated region
    $region6: #{tpu_custom_call.1} parent=1 // pred_check
      _
    $region7: #{tpu_custom_call.1} parent=1 // pred_check_branch
      %21 = sbr.rel (0) target = $region9
    $region8: #{tpu_custom_call.1} parent=1 // pred_region
      _
    $region9: #{tpu_custom_call.1} parent=1 // pred_fallthru
      _
    // Predicated region
    $region10: #{tpu_custom_call.1} parent=1 // pred_check
      _
    $region11: #{tpu_custom_call.1} parent=1 // pred_check_branch
      %23 = sbr.rel (0) target = $region13
    $region12: #{tpu_custom_call.1} parent=1 // pred_region
      _
    $region13: #{tpu_custom_call.1} parent=1 // pred_fallthru
      _
    // Predicated region
    $region14: #{tpu_custom_call.1} parent=1 // pred_check
      _
    $region15: #{tpu_custom_call.1} parent=1 // pred_check_branch
      %25 = sbr.rel (0) target = $region17
    $region16: #{tpu_custom_call.1} parent=1 // pred_region
      _
    $region17: #{tpu_custom_call.1} parent=1 // pred_fallthru
      _
    // Predicated region
    $region18: #{tpu_custom_call.1} parent=1 // pred_check
      _
    $region19: #{tpu_custom_call.1} parent=1 // pred_check_branch
      %27 = sbr.rel (0) target = $region21
    $region20: #{tpu_custom_call.1} parent=1 // pred_region
      _
    $region21: #{tpu_custom_call.1} parent=1 // pred_fallthru
      _
    // Predicated region
    $region22: #{tpu_custom_call.1} parent=1 // pred_check
      _
    $region23: #{tpu_custom_call.1} parent=1 // pred_check_branch
      %29 = sbr.rel (0) target = $region25
    $region24: #{tpu_custom_call.1} parent=1 // pred_region
      _
    $region25: #{tpu_custom_call.1} parent=1 // pred_fallthru
      _
    %v30 = vld [vmem:[%s2] sm:$0xff]
    %v31 = vld [vmem:[%s2 + $0x8] sm:$0xff]
    %v32 = vld [vmem:[%s2 + $0x10] sm:$0xff]
    %v33 = vld [vmem:[%s2 + $0x18] sm:$0xff]
    %v34 = vld [vmem:[%s0] sm:$0xff]
    %v35 = vld [vmem:[%s0 + $0x8] sm:$0xff]
    %v36 = vld [vmem:[%s0 + $0x10] sm:$0xff]
    %v37 = vld [vmem:[%s0 + $0x18] sm:$0xff]
    %v38 = vld [vmem:[%s0 + $0x20] sm:$0xff]
    %v39 = vld [vmem:[%s0 + $0x28] sm:$0xff]
    %v40 = vld [vmem:[%s0 + $0x30] sm:$0xff]
    %v41 = vld [vmem:[%s0 + $0x38] sm:$0xff]
    %v42 = vld [vmem:[%s1] sm:$0xf]
    %v43 = vld [vmem:[%s3] sm:$0x1]
    %v45 = vlaneseq
    %v46 = vshrl.u32 %v45, 7
    %v47 = vsub.s32 0, %v46
    %v48 = vrot.slane %v43, %v47
    %vm50 = vcmask 31744
    %v52 = vsel %vm50, %v34, 0
    %v55 = vsel %vm50, %v35, 0
    %v58 = vsel %vm50, %v36, 0
    %v61 = vsel %vm50, %v37, 0
    %v64 = vsel %vm50, %v38, 0
    %v67 = vsel %vm50, %v39, 0
    %v70 = vsel %vm50, %v40, 0
    %v73 = vsel %vm50, %v41, 0
    %vm75 = vcmask 1043456
    %v77 = vsel %vm75, %v42, 0
    %79 = vmatprep.subr.mxu0 0.0
    %80 = vmatpush1.msra.mxu0 0.0
    %81 = vmatprep.subr.mxu0 0.0
    %82 = vmatpush1.msra.mxu0 0.0
    %83 = vmatprep.subr.mxu0 0.0
    %84 = vmatpush1.msra.mxu0 0.0
    %85 = vmatprep.subr.mxu0 0.0
    %86 = vmatpush1.msra.mxu0 0.0
    %87 = vmatprep.subr.mxu0 0.0
    %88 = vmatpush1.msra.mxu0 0.0
    %89 = vmatprep.subr.mxu0 0.0
    %90 = vmatpush1.msra.mxu0 0.0
    %91 = vmatprep.subr.mxu0 0.0
    %92 = vmatpush1.msra.mxu0 0.0
    %93 = vmatprep.subr.mxu0 0.0
    %94 = vmatpush1.msra.mxu0 0.0
    %95 = vmatprep.subr.mxu0 0.0
    %96 = vmatpush1.msra.mxu0 0.0
    %97 = vmatprep.subr.mxu0 0.0
    %98 = vmatpush1.msra.mxu0 0.0
    %99 = vmatprep.subr.mxu0 0.0
    %100 = vmatpush1.msra.mxu0 0.0
    %101 = vmatprep.subr.mxu0 0.0
    %102 = vmatpush1.msra.mxu0 0.0
    %103 = vmatprep.subr.mxu0 0.0
    %104 = vmatpush1.msra.mxu0 0.0
    %105 = vmatprep.subr.mxu0 0.0
    %106 = vmatpush1.msra.mxu0 0.0
    %107 = vmatprep.subr.mxu0 0.0
    %108 = vmatpush1.msra.mxu0 0.0
    %109 = vmatprep.subr.mxu0 0.0
    %110 = vmatpush1.msra.mxu0 %v77
    %111 = vmatprep.subr.mxu0 0.0
    %112 = vmatpush2.msra.mxu0 0.0
    %113 = vmatprep.subr.mxu0 0.0
    %114 = vmatpush2.msra.mxu0 0.0
    %115 = vmatprep.subr.mxu0 0.0
    %116 = vmatpush2.msra.mxu0 0.0
    %117 = vmatprep.subr.mxu0 0.0
    %118 = vmatpush2.msra.mxu0 0.0
    %119 = vmatprep.subr.mxu0 0.0
    %120 = vmatpush2.msra.mxu0 0.0
    %121 = vmatprep.subr.mxu0 0.0
    %122 = vmatpush2.msra.mxu0 0.0
    %123 = vmatprep.subr.mxu0 0.0
    %124 = vmatpush2.msra.mxu0 0.0
    %125 = vmatprep.subr.mxu0 0.0
    %126 = vmatpush2.msra.mxu0 0.0
    %127 = vmatprep.subr.mxu0 0.0
    %128 = vmatpush2.msra.mxu0 0.0
    %129 = vmatprep.subr.mxu0 0.0
    %130 = vmatpush2.msra.mxu0 0.0
    %131 = vmatprep.subr.mxu0 0.0
    %132 = vmatpush2.msra.mxu0 0.0
    %133 = vmatprep.subr.mxu0 0.0
    %134 = vmatpush2.msra.mxu0 0.0
    %135 = vmatprep.subr.mxu0 0.0
    %136 = vmatpush2.msra.mxu0 0.0
    %137 = vmatprep.subr.mxu0 0.0
    %138 = vmatpush2.msra.mxu0 0.0
    %139 = vmatprep.subr.mxu0 0.0
    %140 = vmatpush2.msra.mxu0 0.0
    %141 = vmatprep.subr.mxu0 0.0
    %142 = vmatpush2.msra.mxu0 0.0
    %143 = vmatprep.mubr.f32.mxu0 0.0
    %144 = vmatmul.mubr.f32.gmra.mxu0 %v52
    %v145 = vpop.f32.mrf.mxu0
    %v146 = vadd.f32 %v48, %v145
    %v147 = vpop.f32.mrf.mxu0
    %148 = vmatprep.mubr.f32.mxu0 0.0
    %149 = vmatmul.mubr.f32.gmra.mxu0 %v55
    %v150 = vpop.f32.mrf.mxu0
    %v151 = vadd.f32 %v48, %v150
    %v152 = vpop.f32.mrf.mxu0
    %153 = vmatprep.mubr.f32.mxu0 0.0
    %154 = vmatmul.mubr.f32.gmra.mxu0 %v58
    %v155 = vpop.f32.mrf.mxu0
    %v156 = vadd.f32 %v48, %v155
    %v157 = vpop.f32.mrf.mxu0
    %158 = vmatprep.mubr.f32.mxu0 0.0
    %159 = vmatmul.mubr.f32.gmra.mxu0 %v61
    %v160 = vpop.f32.mrf.mxu0
    %v161 = vadd.f32 %v48, %v160
    %v162 = vpop.f32.mrf.mxu0
    %163 = vmatprep.mubr.f32.mxu0 0.0
    %164 = vmatmul.mubr.f32.gmra.mxu0 %v64
    %v165 = vpop.f32.mrf.mxu0
    %v166 = vadd.f32 %v48, %v165
    %v167 = vpop.f32.mrf.mxu0
    %168 = vmatprep.mubr.f32.mxu0 0.0
    %169 = vmatmul.mubr.f32.gmra.mxu0 %v67
    %v170 = vpop.f32.mrf.mxu0
    %v171 = vadd.f32 %v48, %v170
    %v172 = vpop.f32.mrf.mxu0
    %173 = vmatprep.mubr.f32.mxu0 0.0
    %174 = vmatmul.mubr.f32.gmra.mxu0 %v70
    %v175 = vpop.f32.mrf.mxu0
    %v176 = vadd.f32 %v48, %v175
    %v177 = vpop.f32.mrf.mxu0
    %178 = vmatprep.mubr.f32.mxu0 0.0
    %179 = vmatmul.mubr.f32.gmra.mxu0 %v73
    %v180 = vpop.f32.mrf.mxu0
    %v181 = vadd.f32 %v48, %v180
    %v182 = vpop.f32.mrf.mxu0
    %183 = vdwg.mxu0
    %184 = vst [vmem:[#allocation2] sm:$0xff] %v146
    %185 = vst [vmem:[#allocation2 + $0x8] sm:$0xff] %v151
    %186 = vst [vmem:[#allocation2 + $0x10] sm:$0xff] %v156
    %187 = vst [vmem:[#allocation2 + $0x18] sm:$0xff] %v161
    %188 = vst [vmem:[#allocation2 + $0x20] sm:$0xff] %v166
    %189 = vst [vmem:[#allocation2 + $0x28] sm:$0xff] %v171
    %190 = vst [vmem:[#allocation2 + $0x30] sm:$0xff] %v176
    %191 = vst [vmem:[#allocation2 + $0x38] sm:$0xff] %v181
    %v192 = vld [vmem:[#allocation2] sm:$0xff]
    %vm193 = vcmask 261120
    %v195 = vsel %vm193, 0.0, 0
    %197 = vmatprep.subr.mxu0 0.0
    %198 = vmatpush1.msra.mxu0 0.0
    %199 = vmatprep.subr.mxu0 0.0
    %200 = vmatpush1.msra.mxu0 0.0
    %201 = vmatprep.subr.mxu0 0.0
    %202 = vmatpush1.msra.mxu0 0.0
    %203 = vmatprep.subr.mxu0 0.0
    %204 = vmatpush1.msra.mxu0 0.0
    %205 = vmatprep.subr.mxu0 0.0
    %206 = vmatpush1.msra.mxu0 0.0
    %207 = vmatprep.subr.mxu0 0.0
    %208 = vmatpush1.msra.mxu0 0.0
    %209 = vmatprep.subr.mxu0 0.0
    %210 = vmatpush1.msra.mxu0 0.0
    %211 = vmatprep.subr.mxu0 0.0
    %212 = vmatpush1.msra.mxu0 0.0
    %213 = vmatprep.subr.mxu0 0.0
    %214 = vmatpush1.msra.mxu0 0.0
    %215 = vmatprep.subr.mxu0 0.0
    %216 = vmatpush1.msra.mxu0 0.0
    %217 = vmatprep.subr.mxu0 0.0
    %218 = vmatpush1.msra.mxu0 0.0
    %219 = vmatprep.subr.mxu0 0.0
    %220 = vmatpush1.msra.mxu0 0.0
    %221 = vmatprep.subr.mxu0 0.0
    %222 = vmatpush1.msra.mxu0 %v33
    %223 = vmatprep.subr.mxu0 0.0
    %224 = vmatpush1.msra.mxu0 %v32
    %225 = vmatprep.subr.mxu0 0.0
    %226 = vmatpush1.msra.mxu0 %v31
    %227 = vmatprep.subr.mxu0 0.0
    %228 = vmatpush1.msra.mxu0 %v30
    %229 = vmatprep.subr.mxu0 0.0
    %230 = vmatpush2.msra.mxu0 0.0
    %231 = vmatprep.subr.mxu0 0.0
    %232 = vmatpush2.msra.mxu0 0.0
    %233 = vmatprep.subr.mxu0 0.0
    %234 = vmatpush2.msra.mxu0 0.0
    %235 = vmatprep.subr.mxu0 0.0
    %236 = vmatpush2.msra.mxu0 0.0
    %237 = vmatprep.subr.mxu0 0.0
    %238 = vmatpush2.msra.mxu0 0.0
    %239 = vmatprep.subr.mxu0 0.0
    %240 = vmatpush2.msra.mxu0 0.0
    %241 = vmatprep.subr.mxu0 0.0
    %242 = vmatpush2.msra.mxu0 0.0
    %243 = vmatprep.subr.mxu0 0.0
    %244 = vmatpush2.msra.mxu0 0.0
    %245 = vmatprep.subr.mxu0 0.0
    %246 = vmatpush2.msra.mxu0 0.0
    %247 = vmatprep.subr.mxu0 0.0
    %248 = vmatpush2.msra.mxu0 0.0
    %249 = vmatprep.subr.mxu0 0.0
    %250 = vmatpush2.msra.mxu0 0.0
    %251 = vmatprep.subr.mxu0 0.0
    %252 = vmatpush2.msra.mxu0 0.0
    %253 = vmatprep.subr.mxu0 0.0
    %254 = vmatpush2.msra.mxu0 0.0
    %255 = vmatprep.subr.mxu0 0.0
    %256 = vmatpush2.msra.mxu0 0.0
    %257 = vmatprep.subr.mxu0 0.0
    %258 = vmatpush2.msra.mxu0 0.0
    %259 = vmatprep.subr.mxu0 0.0
    %260 = vmatpush2.msra.mxu0 0.0
    %261 = vmatprep.mubr.f32.mxu0 0.0
    %262 = vmatmul.mubr.f32.gmra.mxu0 %v195
    %v263 = vpop.f32.mrf.mxu0
    %v264 = vadd.f32 0.0, %v263
    %v265 = vpop.f32.mrf.mxu0
    %266 = vdwg.mxu0
    %v267 = vadd.f32 %v192, %v264
    %v268 = vxor.u32 %v267, 2147483648
    %v269 = vmul.f32 %v268, 1.442695
    %v270 = vpow.pop %v269
    %v271 = vadd.f32 %v270, 1.0
    %v272 = vrcp.pop %v271
    %v273 = vmul.f32 1.0, %v272
    %v274 = vtanh.pop %v267
    %v275 = vmul.f32 %v273, 0.0
    %277 = vrot.lane.b32.xlu0 %v274, 64
    %v278 = vpop.permute.xlu0 %277
    %v280 = vmul.f32 %v273, %v278
    %282 = vrot.lane.b32.xlu0 %v280, 32
    %v283 = vpop.permute.xlu0 %282
    %v285 = vadd.f32 %v275, %v283
    %v286 = vtanh.pop %v285
    %288 = vrot.lane.b32.xlu0 %v286, 64
    %v289 = vpop.permute.xlu0 %288
    %v291 = vmul.f32 %v273, %v289
    %s292 = scalar_lea.vmem [#allocation2], 8
    %v293 = vld [vmem:[%s292] sm:$0xff]
    %295 = vrot.lane.b32.xlu0 %v291, 32
    %v296 = vpop.permute.xlu0 %295
    %v297 = vsel %vm193, %v296, 0
    %299 = vmatprep.subr.mxu0 0.0
    %300 = vmatpush1.msra.mxu0 0.0
    %301 = vmatprep.subr.mxu0 0.0
    %302 = vmatpush1.msra.mxu0 0.0
    %303 = vmatprep.subr.mxu0 0.0
    %304 = vmatpush1.msra.mxu0 0.0
    %305 = vmatprep.subr.mxu0 0.0
    %306 = vmatpush1.msra.mxu0 0.0
    %307 = vmatprep.subr.mxu0 0.0
    %308 = vmatpush1.msra.mxu0 0.0
    %309 = vmatprep.subr.mxu0 0.0
    %310 = vmatpush1.msra.mxu0 0.0
    %311 = vmatprep.subr.mxu0 0.0
    %312 = vmatpush1.msra.mxu0 0.0
    %313 = vmatprep.subr.mxu0 0.0
    %314 = vmatpush1.msra.mxu0 0.0
    %315 = vmatprep.subr.mxu0 0.0
    %316 = vmatpush1.msra.mxu0 0.0
    %317 = vmatprep.subr.mxu0 0.0
    %318 = vmatpush1.msra.mxu0 0.0
    %319 = vmatprep.subr.mxu0 0.0
    %320 = vmatpush1.msra.mxu0 0.0
    %321 = vmatprep.subr.mxu0 0.0
    %322 = vmatpush1.msra.mxu0 0.0
    %323 = vmatprep.subr.mxu0 0.0
    %324 = vmatpush1.msra.mxu0 %v33
    %325 = vmatprep.subr.mxu0 0.0
    %326 = vmatpush1.msra.mxu0 %v32
    %327 = vmatprep.subr.mxu0 0.0
    %328 = vmatpush1.msra.mxu0 %v31
    %329 = vmatprep.subr.mxu0 0.0
    %330 = vmatpush1.msra.mxu0 %v30
    %331 = vmatprep.subr.mxu0 0.0
    %332 = vmatpush2.msra.mxu0 0.0
    %333 = vmatprep.subr.mxu0 0.0
    %334 = vmatpush2.msra.mxu0 0.0
    %335 = vmatprep.subr.mxu0 0.0
    %336 = vmatpush2.msra.mxu0 0.0
    %337 = vmatprep.subr.mxu0 0.0
    %338 = vmatpush2.msra.mxu0 0.0
    %339 = vmatprep.subr.mxu0 0.0
    %340 = vmatpush2.msra.mxu0 0.0
    %341 = vmatprep.subr.mxu0 0.0
    %342 = vmatpush2.msra.mxu0 0.0
    %343 = vmatprep.subr.mxu0 0.0
    %344 = vmatpush2.msra.mxu0 0.0
    %345 = vmatprep.subr.mxu0 0.0
    %346 = vmatpush2.msra.mxu0 0.0
    %347 = vmatprep.subr.mxu0 0.0
    %348 = vmatpush2.msra.mxu0 0.0
    %349 = vmatprep.subr.mxu0 0.0
    %350 = vmatpush2.msra.mxu0 0.0
    %351 = vmatprep.subr.mxu0 0.0
    %352 = vmatpush2.msra.mxu0 0.0
    %353 = vmatprep.subr.mxu0 0.0
    %354 = vmatpush2.msra.mxu0 0.0
    %355 = vmatprep.subr.mxu0 0.0
    %356 = vmatpush2.msra.mxu0 0.0
    %357 = vmatprep.subr.mxu0 0.0
    %358 = vmatpush2.msra.mxu0 0.0
    %359 = vmatprep.subr.mxu0 0.0
    %360 = vmatpush2.msra.mxu0 0.0
    %361 = vmatprep.subr.mxu0 0.0
    %362 = vmatpush2.msra.mxu0 0.0
    %363 = vmatprep.mubr.f32.mxu0 0.0
    %364 = vmatmul.mubr.f32.gmra.mxu0 %v297
    %v365 = vpop.f32.mrf.mxu0
    %v366 = vadd.f32 0.0, %v365
    %v367 = vpop.f32.mrf.mxu0
    %368 = vdwg.mxu0
    %v369 = vadd.f32 %v293, %v366
    %v370 = vxor.u32 %v369, 2147483648
    %v371 = vmul.f32 %v370, 1.442695
    %v372 = vpow.pop %v371
    %v373 = vadd.f32 %v372, 1.0
    %v374 = vrcp.pop %v373
    %v375 = vmul.f32 1.0, %v374
    %v376 = vtanh.pop %v369
    %v377 = vmul.f32 %v375, %v285
    %379 = vrot.lane.b32.xlu0 %v376, 64
    %v380 = vpop.permute.xlu0 %379
    %v382 = vmul.f32 %v375, %v380
    %384 = vrot.lane.b32.xlu0 %v382, 32
    %v385 = vpop.permute.xlu0 %384
    %v387 = vadd.f32 %v377, %v385
    %v388 = vtanh.pop %v387
    %390 = vrot.lane.b32.xlu0 %v388, 64
    %v391 = vpop.permute.xlu0 %390
    %v393 = vmul.f32 %v375, %v391
    %s394 = scalar_lea.vmem [#allocation2], 16
    %v395 = vld [vmem:[%s394] sm:$0xff]
    %397 = vrot.lane.b32.xlu0 %v393, 32
    %v398 = vpop.permute.xlu0 %397
    %v399 = vsel %vm193, %v398, 0
    %401 = vmatprep.subr.mxu0 0.0
    %402 = vmatpush1.msra.mxu0 0.0
    %403 = vmatprep.subr.mxu0 0.0
    %404 = vmatpush1.msra.mxu0 0.0
    %405 = vmatprep.subr.mxu0 0.0
    %406 = vmatpush1.msra.mxu0 0.0
    %407 = vmatprep.subr.mxu0 0.0
    %408 = vmatpush1.msra.mxu0 0.0
    %409 = vmatprep.subr.mxu0 0.0
    %410 = vmatpush1.msra.mxu0 0.0
    %411 = vmatprep.subr.mxu0 0.0
    %412 = vmatpush1.msra.mxu0 0.0
    %413 = vmatprep.subr.mxu0 0.0
    %414 = vmatpush1.msra.mxu0 0.0
    %415 = vmatprep.subr.mxu0 0.0
    %416 = vmatpush1.msra.mxu0 0.0
    %417 = vmatprep.subr.mxu0 0.0
    %418 = vmatpush1.msra.mxu0 0.0
    %419 = vmatprep.subr.mxu0 0.0
    %420 = vmatpush1.msra.mxu0 0.0
    %421 = vmatprep.subr.mxu0 0.0
    %422 = vmatpush1.msra.mxu0 0.0
    %423 = vmatprep.subr.mxu0 0.0
    %424 = vmatpush1.msra.mxu0 0.0
    %425 = vmatprep.subr.mxu0 0.0
    %426 = vmatpush1.msra.mxu0 %v33
    %427 = vmatprep.subr.mxu0 0.0
    %428 = vmatpush1.msra.mxu0 %v32
    %429 = vmatprep.subr.mxu0 0.0
    %430 = vmatpush1.msra.mxu0 %v31
    %431 = vmatprep.subr.mxu0 0.0
    %432 = vmatpush1.msra.mxu0 %v30
    %433 = vmatprep.subr.mxu0 0.0
    %434 = vmatpush2.msra.mxu0 0.0
    %435 = vmatprep.subr.mxu0 0.0
    %436 = vmatpush2.msra.mxu0 0.0
    %437 = vmatprep.subr.mxu0 0.0
    %438 = vmatpush2.msra.mxu0 0.0
    %439 = vmatprep.subr.mxu0 0.0
    %440 = vmatpush2.msra.mxu0 0.0
    %441 = vmatprep.subr.mxu0 0.0
    %442 = vmatpush2.msra.mxu0 0.0
    %443 = vmatprep.subr.mxu0 0.0
    %444 = vmatpush2.msra.mxu0 0.0
    %445 = vmatprep.subr.mxu0 0.0
    %446 = vmatpush2.msra.mxu0 0.0
    %447 = vmatprep.subr.mxu0 0.0
    %448 = vmatpush2.msra.mxu0 0.0
    %449 = vmatprep.subr.mxu0 0.0
    %450 = vmatpush2.msra.mxu0 0.0
    %451 = vmatprep.subr.mxu0 0.0
    %452 = vmatpush2.msra.mxu0 0.0
    %453 = vmatprep.subr.mxu0 0.0
    %454 = vmatpush2.msra.mxu0 0.0
    %455 = vmatprep.subr.mxu0 0.0
    %456 = vmatpush2.msra.mxu0 0.0
    %457 = vmatprep.subr.mxu0 0.0
    %458 = vmatpush2.msra.mxu0 0.0
    %459 = vmatprep.subr.mxu0 0.0
    %460 = vmatpush2.msra.mxu0 0.0
    %461 = vmatprep.subr.mxu0 0.0
    %462 = vmatpush2.msra.mxu0 0.0
    %463 = vmatprep.subr.mxu0 0.0
    %464 = vmatpush2.msra.mxu0 0.0
    %465 = vmatprep.mubr.f32.mxu0 0.0
    %466 = vmatmul.mubr.f32.gmra.mxu0 %v399
    %v467 = vpop.f32.mrf.mxu0
    %v468 = vadd.f32 0.0, %v467
    %v469 = vpop.f32.mrf.mxu0
    %470 = vdwg.mxu0
    %v471 = vadd.f32 %v395, %v468
    %v472 = vxor.u32 %v471, 2147483648
    %v473 = vmul.f32 %v472, 1.442695
    %v474 = vpow.pop %v473
    %v475 = vadd.f32 %v474, 1.0
    %v476 = vrcp.pop %v475
    %v477 = vmul.f32 1.0, %v476
    %v478 = vtanh.pop %v471
    %v479 = vmul.f32 %v477, %v387
    %481 = vrot.lane.b32.xlu0 %v478, 64
    %v482 = vpop.permute.xlu0 %481
    %v484 = vmul.f32 %v477, %v482
    %486 = vrot.lane.b32.xlu0 %v484, 32
    %v487 = vpop.permute.xlu0 %486
    %v489 = vadd.f32 %v479, %v487
    %v490 = vtanh.pop %v489
    %492 = vrot.lane.b32.xlu0 %v490, 64
    %v493 = vpop.permute.xlu0 %492
    %v495 = vmul.f32 %v477, %v493
    %s496 = scalar_lea.vmem [#allocation2], 24
    %v497 = vld [vmem:[%s496] sm:$0xff]
    %499 = vrot.lane.b32.xlu0 %v495, 32
    %v500 = vpop.permute.xlu0 %499
    %v501 = vsel %vm193, %v500, 0
    %503 = vmatprep.subr.mxu0 0.0
    %504 = vmatpush1.msra.mxu0 0.0
    %505 = vmatprep.subr.mxu0 0.0
    %506 = vmatpush1.msra.mxu0 0.0
    %507 = vmatprep.subr.mxu0 0.0
    %508 = vmatpush1.msra.mxu0 0.0
    %509 = vmatprep.subr.mxu0 0.0
    %510 = vmatpush1.msra.mxu0 0.0
    %511 = vmatprep.subr.mxu0 0.0
    %512 = vmatpush1.msra.mxu0 0.0
    %513 = vmatprep.subr.mxu0 0.0
    %514 = vmatpush1.msra.mxu0 0.0
    %515 = vmatprep.subr.mxu0 0.0
    %516 = vmatpush1.msra.mxu0 0.0
    %517 = vmatprep.subr.mxu0 0.0
    %518 = vmatpush1.msra.mxu0 0.0
    %519 = vmatprep.subr.mxu0 0.0
    %520 = vmatpush1.msra.mxu0 0.0
    %521 = vmatprep.subr.mxu0 0.0
    %522 = vmatpush1.msra.mxu0 0.0
    %523 = vmatprep.subr.mxu0 0.0
    %524 = vmatpush1.msra.mxu0 0.0
    %525 = vmatprep.subr.mxu0 0.0
    %526 = vmatpush1.msra.mxu0 0.0
    %527 = vmatprep.subr.mxu0 0.0
    %528 = vmatpush1.msra.mxu0 %v33
    %529 = vmatprep.subr.mxu0 0.0
    %530 = vmatpush1.msra.mxu0 %v32
    %531 = vmatprep.subr.mxu0 0.0
    %532 = vmatpush1.msra.mxu0 %v31
    %533 = vmatprep.subr.mxu0 0.0
    %534 = vmatpush1.msra.mxu0 %v30
    %535 = vmatprep.subr.mxu0 0.0
    %536 = vmatpush2.msra.mxu0 0.0
    %537 = vmatprep.subr.mxu0 0.0
    %538 = vmatpush2.msra.mxu0 0.0
    %539 = vmatprep.subr.mxu0 0.0
    %540 = vmatpush2.msra.mxu0 0.0
    %541 = vmatprep.subr.mxu0 0.0
    %542 = vmatpush2.msra.mxu0 0.0
    %543 = vmatprep.subr.mxu0 0.0
    %544 = vmatpush2.msra.mxu0 0.0
    %545 = vmatprep.subr.mxu0 0.0
    %546 = vmatpush2.msra.mxu0 0.0
    %547 = vmatprep.subr.mxu0 0.0
    %548 = vmatpush2.msra.mxu0 0.0
    %549 = vmatprep.subr.mxu0 0.0
    %550 = vmatpush2.msra.mxu0 0.0
    %551 = vmatprep.subr.mxu0 0.0
    %552 = vmatpush2.msra.mxu0 0.0
    %553 = vmatprep.subr.mxu0 0.0
    %554 = vmatpush2.msra.mxu0 0.0
    %555 = vmatprep.subr.mxu0 0.0
    %556 = vmatpush2.msra.mxu0 0.0
    %557 = vmatprep.subr.mxu0 0.0
    %558 = vmatpush2.msra.mxu0 0.0
    %559 = vmatprep.subr.mxu0 0.0
    %560 = vmatpush2.msra.mxu0 0.0
    %561 = vmatprep.subr.mxu0 0.0
    %562 = vmatpush2.msra.mxu0 0.0
    %563 = vmatprep.subr.mxu0 0.0
    %564 = vmatpush2.msra.mxu0 0.0
    %565 = vmatprep.subr.mxu0 0.0
    %566 = vmatpush2.msra.mxu0 0.0
    %567 = vmatprep.mubr.f32.mxu0 0.0
    %568 = vmatmul.mubr.f32.gmra.mxu0 %v501
    %v569 = vpop.f32.mrf.mxu0
    %v570 = vadd.f32 0.0, %v569
    %v571 = vpop.f32.mrf.mxu0
    %572 = vdwg.mxu0
    %v573 = vadd.f32 %v497, %v570
    %v574 = vxor.u32 %v573, 2147483648
    %v575 = vmul.f32 %v574, 1.442695
    %v576 = vpow.pop %v575
    %v577 = vadd.f32 %v576, 1.0
    %v578 = vrcp.pop %v577
    %v579 = vmul.f32 1.0, %v578
    %v580 = vtanh.pop %v573
    %v581 = vmul.f32 %v579, %v489
    %583 = vrot.lane.b32.xlu0 %v580, 64
    %v584 = vpop.permute.xlu0 %583
    %v586 = vmul.f32 %v579, %v584
    %588 = vrot.lane.b32.xlu0 %v586, 32
    %v589 = vpop.permute.xlu0 %588
    %v591 = vadd.f32 %v581, %v589
    %v592 = vtanh.pop %v591
    %594 = vrot.lane.b32.xlu0 %v592, 64
    %v595 = vpop.permute.xlu0 %594
    %v597 = vmul.f32 %v579, %v595
    %s598 = scalar_lea.vmem [#allocation2], 32
    %v599 = vld [vmem:[%s598] sm:$0xff]
    %601 = vrot.lane.b32.xlu0 %v597, 32
    %v602 = vpop.permute.xlu0 %601
    %v603 = vsel %vm193, %v602, 0
    %605 = vmatprep.subr.mxu0 0.0
    %606 = vmatpush1.msra.mxu0 0.0
    %607 = vmatprep.subr.mxu0 0.0
    %608 = vmatpush1.msra.mxu0 0.0
    %609 = vmatprep.subr.mxu0 0.0
    %610 = vmatpush1.msra.mxu0 0.0
    %611 = vmatprep.subr.mxu0 0.0
    %612 = vmatpush1.msra.mxu0 0.0
    %613 = vmatprep.subr.mxu0 0.0
    %614 = vmatpush1.msra.mxu0 0.0
    %615 = vmatprep.subr.mxu0 0.0
    %616 = vmatpush1.msra.mxu0 0.0
    %617 = vmatprep.subr.mxu0 0.0
    %618 = vmatpush1.msra.mxu0 0.0
    %619 = vmatprep.subr.mxu0 0.0
    %620 = vmatpush1.msra.mxu0 0.0
    %621 = vmatprep.subr.mxu0 0.0
    %622 = vmatpush1.msra.mxu0 0.0
    %623 = vmatprep.subr.mxu0 0.0
    %624 = vmatpush1.msra.mxu0 0.0
    %625 = vmatprep.subr.mxu0 0.0
    %626 = vmatpush1.msra.mxu0 0.0
    %627 = vmatprep.subr.mxu0 0.0
    %628 = vmatpush1.msra.mxu0 0.0
    %629 = vmatprep.subr.mxu0 0.0
    %630 = vmatpush1.msra.mxu0 %v33
    %631 = vmatprep.subr.mxu0 0.0
    %632 = vmatpush1.msra.mxu0 %v32
    %633 = vmatprep.subr.mxu0 0.0
    %634 = vmatpush1.msra.mxu0 %v31
    %635 = vmatprep.subr.mxu0 0.0
    %636 = vmatpush1.msra.mxu0 %v30
    %637 = vmatprep.subr.mxu0 0.0
    %638 = vmatpush2.msra.mxu0 0.0
    %639 = vmatprep.subr.mxu0 0.0
    %640 = vmatpush2.msra.mxu0 0.0
    %641 = vmatprep.subr.mxu0 0.0
    %642 = vmatpush2.msra.mxu0 0.0
    %643 = vmatprep.subr.mxu0 0.0
    %644 = vmatpush2.msra.mxu0 0.0
    %645 = vmatprep.subr.mxu0 0.0
    %646 = vmatpush2.msra.mxu0 0.0
    %647 = vmatprep.subr.mxu0 0.0
    %648 = vmatpush2.msra.mxu0 0.0
    %649 = vmatprep.subr.mxu0 0.0
    %650 = vmatpush2.msra.mxu0 0.0
    %651 = vmatprep.subr.mxu0 0.0
    %652 = vmatpush2.msra.mxu0 0.0
    %653 = vmatprep.subr.mxu0 0.0
    %654 = vmatpush2.msra.mxu0 0.0
    %655 = vmatprep.subr.mxu0 0.0
    %656 = vmatpush2.msra.mxu0 0.0
    %657 = vmatprep.subr.mxu0 0.0
    %658 = vmatpush2.msra.mxu0 0.0
    %659 = vmatprep.subr.mxu0 0.0
    %660 = vmatpush2.msra.mxu0 0.0
    %661 = vmatprep.subr.mxu0 0.0
    %662 = vmatpush2.msra.mxu0 0.0
    %663 = vmatprep.subr.mxu0 0.0
    %664 = vmatpush2.msra.mxu0 0.0
    %665 = vmatprep.subr.mxu0 0.0
    %666 = vmatpush2.msra.mxu0 0.0
    %667 = vmatprep.subr.mxu0 0.0
    %668 = vmatpush2.msra.mxu0 0.0
    %669 = vmatprep.mubr.f32.mxu0 0.0
    %670 = vmatmul.mubr.f32.gmra.mxu0 %v603
    %v671 = vpop.f32.mrf.mxu0
    %v672 = vadd.f32 0.0, %v671
    %v673 = vpop.f32.mrf.mxu0
    %674 = vdwg.mxu0
    %v675 = vadd.f32 %v599, %v672
    %v676 = vxor.u32 %v675, 2147483648
    %v677 = vmul.f32 %v676, 1.442695
    %v678 = vpow.pop %v677
    %v679 = vadd.f32 %v678, 1.0
    %v680 = vrcp.pop %v679
    %v681 = vmul.f32 1.0, %v680
    %v682 = vtanh.pop %v675
    %v683 = vmul.f32 %v681, %v591
    %685 = vrot.lane.b32.xlu0 %v682, 64
    %v686 = vpop.permute.xlu0 %685
    %v688 = vmul.f32 %v681, %v686
    %690 = vrot.lane.b32.xlu0 %v688, 32
    %v691 = vpop.permute.xlu0 %690
    %v693 = vadd.f32 %v683, %v691
    %v694 = vtanh.pop %v693
    %696 = vrot.lane.b32.xlu0 %v694, 64
    %v697 = vpop.permute.xlu0 %696
    %v699 = vmul.f32 %v681, %v697
    %s700 = scalar_lea.vmem [#allocation2], 40
    %v701 = vld [vmem:[%s700] sm:$0xff]
    %703 = vrot.lane.b32.xlu0 %v699, 32
    %v704 = vpop.permute.xlu0 %703
    %v705 = vsel %vm193, %v704, 0
    %707 = vmatprep.subr.mxu0 0.0
    %708 = vmatpush1.msra.mxu0 0.0
    %709 = vmatprep.subr.mxu0 0.0
    %710 = vmatpush1.msra.mxu0 0.0
    %711 = vmatprep.subr.mxu0 0.0
    %712 = vmatpush1.msra.mxu0 0.0
    %713 = vmatprep.subr.mxu0 0.0
    %714 = vmatpush1.msra.mxu0 0.0
    %715 = vmatprep.subr.mxu0 0.0
    %716 = vmatpush1.msra.mxu0 0.0
    %717 = vmatprep.subr.mxu0 0.0
    %718 = vmatpush1.msra.mxu0 0.0
    %719 = vmatprep.subr.mxu0 0.0
    %720 = vmatpush1.msra.mxu0 0.0
    %721 = vmatprep.subr.mxu0 0.0
    %722 = vmatpush1.msra.mxu0 0.0
    %723 = vmatprep.subr.mxu0 0.0
    %724 = vmatpush1.msra.mxu0 0.0
    %725 = vmatprep.subr.mxu0 0.0
    %726 = vmatpush1.msra.mxu0 0.0
    %727 = vmatprep.subr.mxu0 0.0
    %728 = vmatpush1.msra.mxu0 0.0
    %729 = vmatprep.subr.mxu0 0.0
    %730 = vmatpush1.msra.mxu0 0.0
    %731 = vmatprep.subr.mxu0 0.0
    %732 = vmatpush1.msra.mxu0 %v33
    %733 = vmatprep.subr.mxu0 0.0
    %734 = vmatpush1.msra.mxu0 %v32
    %735 = vmatprep.subr.mxu0 0.0
    %736 = vmatpush1.msra.mxu0 %v31
    %737 = vmatprep.subr.mxu0 0.0
    %738 = vmatpush1.msra.mxu0 %v30
    %739 = vmatprep.subr.mxu0 0.0
    %740 = vmatpush2.msra.mxu0 0.0
    %741 = vmatprep.subr.mxu0 0.0
    %742 = vmatpush2.msra.mxu0 0.0
    %743 = vmatprep.subr.mxu0 0.0
    %744 = vmatpush2.msra.mxu0 0.0
    %745 = vmatprep.subr.mxu0 0.0
    %746 = vmatpush2.msra.mxu0 0.0
    %747 = vmatprep.subr.mxu0 0.0
    %748 = vmatpush2.msra.mxu0 0.0
    %749 = vmatprep.subr.mxu0 0.0
    %750 = vmatpush2.msra.mxu0 0.0
    %751 = vmatprep.subr.mxu0 0.0
    %752 = vmatpush2.msra.mxu0 0.0
    %753 = vmatprep.subr.mxu0 0.0
    %754 = vmatpush2.msra.mxu0 0.0
    %755 = vmatprep.subr.mxu0 0.0
    %756 = vmatpush2.msra.mxu0 0.0
    %757 = vmatprep.subr.mxu0 0.0
    %758 = vmatpush2.msra.mxu0 0.0
    %759 = vmatprep.subr.mxu0 0.0
    %760 = vmatpush2.msra.mxu0 0.0
    %761 = vmatprep.subr.mxu0 0.0
    %762 = vmatpush2.msra.mxu0 0.0
    %763 = vmatprep.subr.mxu0 0.0
    %764 = vmatpush2.msra.mxu0 0.0
    %765 = vmatprep.subr.mxu0 0.0
    %766 = vmatpush2.msra.mxu0 0.0
    %767 = vmatprep.subr.mxu0 0.0
    %768 = vmatpush2.msra.mxu0 0.0
    %769 = vmatprep.subr.mxu0 0.0
    %770 = vmatpush2.msra.mxu0 0.0
    %771 = vmatprep.mubr.f32.mxu0 0.0
    %772 = vmatmul.mubr.f32.gmra.mxu0 %v705
    %v773 = vpop.f32.mrf.mxu0
    %v774 = vadd.f32 0.0, %v773
    %v775 = vpop.f32.mrf.mxu0
    %776 = vdwg.mxu0
    %v777 = vadd.f32 %v701, %v774
    %v778 = vxor.u32 %v777, 2147483648
    %v779 = vmul.f32 %v778, 1.442695
    %v780 = vpow.pop %v779
    %v781 = vadd.f32 %v780, 1.0
    %v782 = vrcp.pop %v781
    %v783 = vmul.f32 1.0, %v782
    %v784 = vtanh.pop %v777
    %v785 = vmul.f32 %v783, %v693
    %787 = vrot.lane.b32.xlu0 %v784, 64
    %v788 = vpop.permute.xlu0 %787
    %v790 = vmul.f32 %v783, %v788
    %792 = vrot.lane.b32.xlu0 %v790, 32
    %v793 = vpop.permute.xlu0 %792
    %v795 = vadd.f32 %v785, %v793
    %v796 = vtanh.pop %v795
    %798 = vrot.lane.b32.xlu0 %v796, 64
    %v799 = vpop.permute.xlu0 %798
    %v801 = vmul.f32 %v783, %v799
    %s802 = scalar_lea.vmem [#allocation2], 48
    %v803 = vld [vmem:[%s802] sm:$0xff]
    %805 = vrot.lane.b32.xlu0 %v801, 32
    %v806 = vpop.permute.xlu0 %805
    %v807 = vsel %vm193, %v806, 0
    %809 = vmatprep.subr.mxu0 0.0
    %810 = vmatpush1.msra.mxu0 0.0
    %811 = vmatprep.subr.mxu0 0.0
    %812 = vmatpush1.msra.mxu0 0.0
    %813 = vmatprep.subr.mxu0 0.0
    %814 = vmatpush1.msra.mxu0 0.0
    %815 = vmatprep.subr.mxu0 0.0
    %816 = vmatpush1.msra.mxu0 0.0
    %817 = vmatprep.subr.mxu0 0.0
    %818 = vmatpush1.msra.mxu0 0.0
    %819 = vmatprep.subr.mxu0 0.0
    %820 = vmatpush1.msra.mxu0 0.0
    %821 = vmatprep.subr.mxu0 0.0
    %822 = vmatpush1.msra.mxu0 0.0
    %823 = vmatprep.subr.mxu0 0.0
    %824 = vmatpush1.msra.mxu0 0.0
    %825 = vmatprep.subr.mxu0 0.0
    %826 = vmatpush1.msra.mxu0 0.0
    %827 = vmatprep.subr.mxu0 0.0
    %828 = vmatpush1.msra.mxu0 0.0
    %829 = vmatprep.subr.mxu0 0.0
    %830 = vmatpush1.msra.mxu0 0.0
    %831 = vmatprep.subr.mxu0 0.0
    %832 = vmatpush1.msra.mxu0 0.0
    %833 = vmatprep.subr.mxu0 0.0
    %834 = vmatpush1.msra.mxu0 %v33
    %835 = vmatprep.subr.mxu0 0.0
    %836 = vmatpush1.msra.mxu0 %v32
    %837 = vmatprep.subr.mxu0 0.0
    %838 = vmatpush1.msra.mxu0 %v31
    %839 = vmatprep.subr.mxu0 0.0
    %840 = vmatpush1.msra.mxu0 %v30
    %841 = vmatprep.subr.mxu0 0.0
    %842 = vmatpush2.msra.mxu0 0.0
    %843 = vmatprep.subr.mxu0 0.0
    %844 = vmatpush2.msra.mxu0 0.0
    %845 = vmatprep.subr.mxu0 0.0
    %846 = vmatpush2.msra.mxu0 0.0
    %847 = vmatprep.subr.mxu0 0.0
    %848 = vmatpush2.msra.mxu0 0.0
    %849 = vmatprep.subr.mxu0 0.0
    %850 = vmatpush2.msra.mxu0 0.0
    %851 = vmatprep.subr.mxu0 0.0
    %852 = vmatpush2.msra.mxu0 0.0
    %853 = vmatprep.subr.mxu0 0.0
    %854 = vmatpush2.msra.mxu0 0.0
    %855 = vmatprep.subr.mxu0 0.0
    %856 = vmatpush2.msra.mxu0 0.0
    %857 = vmatprep.subr.mxu0 0.0
    %858 = vmatpush2.msra.mxu0 0.0
    %859 = vmatprep.subr.mxu0 0.0
    %860 = vmatpush2.msra.mxu0 0.0
    %861 = vmatprep.subr.mxu0 0.0
    %862 = vmatpush2.msra.mxu0 0.0
    %863 = vmatprep.subr.mxu0 0.0
    %864 = vmatpush2.msra.mxu0 0.0
    %865 = vmatprep.subr.mxu0 0.0
    %866 = vmatpush2.msra.mxu0 0.0
    %867 = vmatprep.subr.mxu0 0.0
    %868 = vmatpush2.msra.mxu0 0.0
    %869 = vmatprep.subr.mxu0 0.0
    %870 = vmatpush2.msra.mxu0 0.0
    %871 = vmatprep.subr.mxu0 0.0
    %872 = vmatpush2.msra.mxu0 0.0
    %873 = vmatprep.mubr.f32.mxu0 0.0
    %874 = vmatmul.mubr.f32.gmra.mxu0 %v807
    %v875 = vpop.f32.mrf.mxu0
    %v876 = vadd.f32 0.0, %v875
    %v877 = vpop.f32.mrf.mxu0
    %878 = vdwg.mxu0
    %v879 = vadd.f32 %v803, %v876
    %v880 = vxor.u32 %v879, 2147483648
    %v881 = vmul.f32 %v880, 1.442695
    %v882 = vpow.pop %v881
    %v883 = vadd.f32 %v882, 1.0
    %v884 = vrcp.pop %v883
    %v885 = vmul.f32 1.0, %v884
    %v886 = vtanh.pop %v879
    %v887 = vmul.f32 %v885, %v795
    %889 = vrot.lane.b32.xlu0 %v886, 64
    %v890 = vpop.permute.xlu0 %889
    %v892 = vmul.f32 %v885, %v890
    %894 = vrot.lane.b32.xlu0 %v892, 32
    %v895 = vpop.permute.xlu0 %894
    %v897 = vadd.f32 %v887, %v895
    %v898 = vtanh.pop %v897
    %900 = vrot.lane.b32.xlu0 %v898, 64
    %v901 = vpop.permute.xlu0 %900
    %v903 = vmul.f32 %v885, %v901
    %s904 = scalar_lea.vmem [#allocation2], 56
    %v905 = vld [vmem:[%s904] sm:$0xff]
    %907 = vrot.lane.b32.xlu0 %v903, 32
    %v908 = vpop.permute.xlu0 %907
    %v909 = vsel %vm193, %v908, 0
    %911 = vmatprep.subr.mxu0 0.0
    %912 = vmatpush1.msra.mxu0 0.0
    %913 = vmatprep.subr.mxu0 0.0
    %914 = vmatpush1.msra.mxu0 0.0
    %915 = vmatprep.subr.mxu0 0.0
    %916 = vmatpush1.msra.mxu0 0.0
    %917 = vmatprep.subr.mxu0 0.0
    %918 = vmatpush1.msra.mxu0 0.0
    %919 = vmatprep.subr.mxu0 0.0
    %920 = vmatpush1.msra.mxu0 0.0
    %921 = vmatprep.subr.mxu0 0.0
    %922 = vmatpush1.msra.mxu0 0.0
    %923 = vmatprep.subr.mxu0 0.0
    %924 = vmatpush1.msra.mxu0 0.0
    %925 = vmatprep.subr.mxu0 0.0
    %926 = vmatpush1.msra.mxu0 0.0
    %927 = vmatprep.subr.mxu0 0.0
    %928 = vmatpush1.msra.mxu0 0.0
    %929 = vmatprep.subr.mxu0 0.0
    %930 = vmatpush1.msra.mxu0 0.0
    %931 = vmatprep.subr.mxu0 0.0
    %932 = vmatpush1.msra.mxu0 0.0
    %933 = vmatprep.subr.mxu0 0.0
    %934 = vmatpush1.msra.mxu0 0.0
    %935 = vmatprep.subr.mxu0 0.0
    %936 = vmatpush1.msra.mxu0 %v33
    %937 = vmatprep.subr.mxu0 0.0
    %938 = vmatpush1.msra.mxu0 %v32
    %939 = vmatprep.subr.mxu0 0.0
    %940 = vmatpush1.msra.mxu0 %v31
    %941 = vmatprep.subr.mxu0 0.0
    %942 = vmatpush1.msra.mxu0 %v30
    %943 = vmatprep.subr.mxu0 0.0
    %944 = vmatpush2.msra.mxu0 0.0
    %945 = vmatprep.subr.mxu0 0.0
    %946 = vmatpush2.msra.mxu0 0.0
    %947 = vmatprep.subr.mxu0 0.0
    %948 = vmatpush2.msra.mxu0 0.0
    %949 = vmatprep.subr.mxu0 0.0
    %950 = vmatpush2.msra.mxu0 0.0
    %951 = vmatprep.subr.mxu0 0.0
    %952 = vmatpush2.msra.mxu0 0.0
    %953 = vmatprep.subr.mxu0 0.0
    %954 = vmatpush2.msra.mxu0 0.0
    %955 = vmatprep.subr.mxu0 0.0
    %956 = vmatpush2.msra.mxu0 0.0
    %957 = vmatprep.subr.mxu0 0.0
    %958 = vmatpush2.msra.mxu0 0.0
    %959 = vmatprep.subr.mxu0 0.0
    %960 = vmatpush2.msra.mxu0 0.0
    %961 = vmatprep.subr.mxu0 0.0
    %962 = vmatpush2.msra.mxu0 0.0
    %963 = vmatprep.subr.mxu0 0.0
    %964 = vmatpush2.msra.mxu0 0.0
    %965 = vmatprep.subr.mxu0 0.0
    %966 = vmatpush2.msra.mxu0 0.0
    %967 = vmatprep.subr.mxu0 0.0
    %968 = vmatpush2.msra.mxu0 0.0
    %969 = vmatprep.subr.mxu0 0.0
    %970 = vmatpush2.msra.mxu0 0.0
    %971 = vmatprep.subr.mxu0 0.0
    %972 = vmatpush2.msra.mxu0 0.0
    %973 = vmatprep.subr.mxu0 0.0
    %974 = vmatpush2.msra.mxu0 0.0
    %975 = vmatprep.mubr.f32.mxu0 0.0
    %976 = vmatmul.mubr.f32.gmra.mxu0 %v909
    %v977 = vpop.f32.mrf.mxu0
    %v978 = vadd.f32 0.0, %v977
    %v979 = vpop.f32.mrf.mxu0
    %980 = vdwg.mxu0
    %v981 = vadd.f32 %v905, %v978
    %v982 = vxor.u32 %v981, 2147483648
    %v983 = vmul.f32 %v982, 1.442695
    %v984 = vpow.pop %v983
    %v985 = vadd.f32 %v984, 1.0
    %v986 = vrcp.pop %v985
    %v987 = vmul.f32 1.0, %v986
    %v988 = vtanh.pop %v981
    %v989 = vmul.f32 %v987, %v897
    %991 = vrot.lane.b32.xlu0 %v988, 64
    %v992 = vpop.permute.xlu0 %991
    %v994 = vmul.f32 %v987, %v992
    %996 = vrot.lane.b32.xlu0 %v994, 32
    %v997 = vpop.permute.xlu0 %996
    %v999 = vadd.f32 %v989, %v997
    %v1000 = vtanh.pop %v999
    %1002 = vrot.lane.b32.xlu0 %v1000, 64
    %v1003 = vpop.permute.xlu0 %1002
    %v1005 = vmul.f32 %v987, %v1003
    %1007 = vrot.lane.b32.xlu0 %v1005, 32
    %v1008 = vpop.permute.xlu0 %1007
    %1010 = vst.msk [vmem:[#allocation4] sm:$0xff] %vm193, %v1008
    %1012 = vrot.lane.b32.xlu0 %v999, 96
    %v1013 = vpop.permute.xlu0 %1012
    %1015 = vst.msk [vmem:[#allocation6] sm:$0xff] %vm193, %v1013
    %v1016 = vld [vmem:[%s4] sm:$0x1]
    %v1018 = vlaneseq
    %v1019 = vshrl.u32 %v1018, 7
    %v1020 = vsub.s32 0, %v1019
    %v1021 = vrot.slane %v1016, %v1020
    %1022 = vrot.lane.b32.xlu0 %v1021, 96
    %v1023 = vpop.permute.xlu0 %1022
    %v1025 = vmul.f32 %v1005, %v1023
    %1027 = vrot.lane.b32.xlu0 %v1025, 32
    %v1028 = vpop.permute.xlu0 %1027
    %v1030 = vsel %vm193, %v1028, 0.0
    %1031 = vadd.xlane.f32.xlu0 %v1030
    %v1032 = vpop.xlane.xlu0 %1031
    %v1033 = vld [vmem:[#allocation3] sm:$0x1]
    %v1035 = vlaneseq
    %v1036 = vshrl.u32 %v1035, 7
    %v1037 = vsub.s32 0, %v1036
    %v1038 = vrot.slane %v1033, %v1037
    %v1040 = vadd.f32 %v1032, %v1038
    %v1041 = vxor.u32 %v1040, 2147483648
    %v1042 = vmul.f32 %v1041, 1.442695
    %v1043 = vpow.pop %v1042
    %v1044 = vadd.f32 %v1043, 1.0
    %v1045 = vrcp.pop %v1044
    %v1046 = vmul.f32 1.0, %v1045
    %vm1047 = vcmask 7168
    %1048 = vst.msk [vmem:[%s6] sm:$0xff] %vm1047, %v1046
    // Predicated region
    $region26: #{tpu_custom_call.1} parent=1 // pred_check
      _
    $region27: #{tpu_custom_call.1} parent=1 // pred_check_branch
      %1050 = sbr.rel (0) target = $region29
    $region28: #{tpu_custom_call.1} parent=1 // pred_region
      _
    $region29: #{tpu_custom_call.1} parent=1 // pred_fallthru
      _
    // Predicated region
    $region30: #{tpu_custom_call.1} parent=1 // pred_check
      _
    $region31: #{tpu_custom_call.1} parent=1 // pred_check_branch
      %1052 = sbr.rel (0) target = $region33
    $region32: #{tpu_custom_call.1} parent=1 // pred_region
      %s1054 = ssub.s32 128, 128
      %1055 = vsyncadd [#allocation5], %s1054
      %s1057 = sshll.u32 [#allocation4], 4
      %s1058 = int_to_ptr.vmem [resolvable:$true] %s1057
      %1060 = dma.vmem_to_hbm [thread:$0]  %s1058, 128, %s7, [#allocation5]
    $region33: #{tpu_custom_call.1} parent=1 // pred_fallthru
      _
    // Predicated region
    $region34: #{tpu_custom_call.1} parent=1 // pred_check
      _
    $region35: #{tpu_custom_call.1} parent=1 // pred_check_branch
      %1062 = sbr.rel (0) target = $region37
    $region36: #{tpu_custom_call.1} parent=1 // pred_region
      %s1064 = ssub.s32 128, 128
      %1065 = vsyncadd [#allocation7], %s1064
      %s1067 = sshll.u32 [#allocation6], 4
      %s1068 = int_to_ptr.vmem [resolvable:$true] %s1067
      %1070 = dma.vmem_to_hbm [thread:$0]  %s1068, 128, %s8, [#allocation7]
    $region37: #{tpu_custom_call.1} parent=1 // pred_fallthru
      _
    // Predicated region
    $region38: #{tpu_custom_call.1} parent=1 // pred_check
      _
    $region39: #{tpu_custom_call.1} parent=1 // pred_check_branch
      %1072 = sbr.rel (0) target = $region41
    $region40: #{tpu_custom_call.1} parent=1 // pred_region
      _
    $region41: #{tpu_custom_call.1} parent=1 // pred_fallthru
      _
    // Predicated region
    $region42: #{tpu_custom_call.1} parent=1 // pred_check
      _
    $region43: #{tpu_custom_call.1} parent=1 // pred_check_branch
      %1074 = sbr.rel (0) target = $region45
    $region44: #{tpu_custom_call.1} parent=1 // pred_region
      %1075 = dma.done [#allocation5], 128
    $region45: #{tpu_custom_call.1} parent=1 // pred_fallthru
      _
    // Predicated region
    $region46: #{tpu_custom_call.1} parent=1 // pred_check
      _
    $region47: #{tpu_custom_call.1} parent=1 // pred_check_branch
      %1077 = sbr.rel (0) target = $region49
    $region48: #{tpu_custom_call.1} parent=1 // pred_region
      %1078 = dma.done [#allocation7], 128
    $region49: #{tpu_custom_call.1} parent=1 // pred_fallthru
      _
    %1079 = vsyncpa [#allocation5], 1
    %1080 = vsyncpa [#allocation7], 1

</llo_original>
